<compile_context>
chip_gen: v7x
topology: tpu7x:2x2x1
jax: 0.10.0
libtpu: 0.0.40
codegen_flags: <defaults>
</compile_context>

<pallas_src>
import jax
import jax.numpy as jnp
from jax.experimental import pallas as pl
from jax.experimental.pallas import tpu as pltpu

LANE = 128          # vreg lane width
SUBLANE_BF16 = 16   # bf16 packs 2 rows per sublane -> keep batch tiles % 16


def _round_up(n, m):
    return ((n + m - 1) // m) * m


def _pad2d(a, rows, cols):
    return jnp.pad(a, ((0, rows - a.shape[0]), (0, cols - a.shape[1])))


def mlp3_kernel(x_ref, w1_ref, b1_ref, w2_ref, b2_ref, w3_ref, b3_ref, o_ref):
    """One batch tile: bf16 MXU matmuls, f32 accumulate + bias + ReLU epilogue."""
    x = x_ref[...]                                                # (bb, 128) bf16

    h1 = jnp.dot(x, w1_ref[...], preferred_element_type=jnp.float32)
    h1 = jnp.maximum(h1 + b1_ref[...], 0.0)                       # f32 VPU epilogue

    h2 = jnp.dot(h1.astype(w2_ref.dtype), w2_ref[...],
                 preferred_element_type=jnp.float32)
    h2 = jnp.maximum(h2 + b2_ref[...], 0.0)

    out = jnp.dot(h2.astype(w3_ref.dtype), w3_ref[...],
                  preferred_element_type=jnp.float32)
    o_ref[...] = (out + b3_ref[...]).astype(o_ref.dtype)          # lane-dense store


def make_mlp3(w1, b1, w2, b2, w3, b3, *, max_grid_steps=2):
    """One-time param prep (padding + bf16 casts hoisted out of the hot path).

    Weights are stored (in_features, out_features); biases are (out_features,).
    Returns a jitted forward: x (B, in_features) f32 -> (B, out_features) f32.
    """
    in_f, h1 = w1.shape
    _, h2 = w2.shape
    _, out_f = w3.shape

    kp = _round_up(in_f, LANE)       # lane-dense input feature dim
    h1p = _round_up(h1, LANE)
    h2p = _round_up(h2, LANE)
    outp = _round_up(out_f, LANE)

    # Padded/cast params are closed over -> computed once, constants under jit.
    # Zero-padded W rows/cols + zero bias + ReLU keep padded lanes exactly 0.
    w1p = _pad2d(w1, kp, h1p).astype(jnp.bfloat16)
    w2p = _pad2d(w2, h1p, h2p).astype(jnp.bfloat16)
    w3p = _pad2d(w3, h2p, outp).astype(jnp.bfloat16)
    b1p = _pad2d(b1.reshape(1, -1), 1, h1p).astype(jnp.float32)
    b2p = _pad2d(b2.reshape(1, -1), 1, h2p).astype(jnp.float32)
    b3p = _pad2d(b3.reshape(1, -1), 1, outp).astype(jnp.float32)

    rep = lambda shape: pl.BlockSpec(shape, lambda i: (0, 0))     # grid-invariant

    @jax.jit
    def fwd(x):
        orig_b = x.shape[0]

        # Collapse the grid: 1 step (no per-step overhead) unless the batch
        # splits cleanly into 2 bf16-aligned tiles, in which case 2 steps give
        # v7x's two TensorCores one tile each (costs only one extra ~0.35 us
        # step on single-TC v5e/v6e).
        b_min = _round_up(orig_b, SUBLANE_BF16)
        steps = 1
        if (max_grid_steps >= 2 and b_min >= 2 * SUBLANE_BF16
                and b_min % (2 * SUBLANE_BF16) == 0):
            steps = 2
        bb = b_min // steps
        b_pad = bb * steps

        xp = x.astype(jnp.bfloat16)
        if b_pad != orig_b or kp != in_f:
            xp = jnp.pad(xp, ((0, b_pad - orig_b), (0, kp - in_f)))

        flops = 2 * orig_b * (in_f * h1 + h1 * h2 + h2 * out_f)
        bytes_accessed = int(
            b_pad * kp * 2                                       # x (bf16)
            + (kp * h1p + h1p * h2p + h2p * outp) * 2            # weights (bf16)
            + (h1p + h2p + outp) * 4                             # biases (f32)
            + b_pad * outp * 4)                                  # output (f32)

        out = pl.pallas_call(
            mlp3_kernel,
            out_shape=jax.ShapeDtypeStruct((b_pad, outp), jnp.float32),
            grid=(steps,),
            in_specs=[
                pl.BlockSpec((bb, kp), lambda i: (i, 0)),        # x tile, lane-dense K
                rep((kp, h1p)), rep((1, h1p)),                   # W1, b1 (resident)
                rep((h1p, h2p)), rep((1, h2p)),                  # W2, b2
                rep((h2p, outp)), rep((1, outp)),                # W3, b3
            ],
            out_specs=pl.BlockSpec((bb, outp), lambda i: (i, 0)),
            compiler_params=pltpu.CompilerParams(
                dimension_semantics=("parallel",)),              # 2-TC split on v7x
            cost_estimate=pl.CostEstimate(
                flops=flops, transcendentals=0, bytes_accessed=bytes_accessed),
        )(xp, w1p, b1p, w2p, b2p, w3p, b3p)

        return out[:orig_b, :out_f]

    return fwd


def init_linear(key, in_f, out_f):
    """Deterministic init mimicking PyTorch nn.Linear default (uniform bounds)."""
    kw, kb = jax.random.split(key)
    bound = 1.0 / jnp.sqrt(in_f)
    # Stored as (in_features, out_features) so the kernel does x @ W.
    w = jax.random.uniform(kw, (in_f, out_f), jnp.float32, -bound, bound)
    b = jax.random.uniform(kb, (out_f,), jnp.float32, -bound, bound)
    return w, b


def ref_forward_bf16(x, w1, b1, w2, b2, w3, b3):
    """Pure-JAX reference with the same bf16 dot operands / f32 accumulation."""
    c = lambda a: a.astype(jnp.bfloat16)
    h = jnp.maximum(jnp.dot(c(x), c(w1), preferred_element_type=jnp.float32) + b1, 0.0)
    h = jnp.maximum(jnp.dot(c(h), c(w2), preferred_element_type=jnp.float32) + b2, 0.0)
    return jnp.dot(c(h), c(w3), preferred_element_type=jnp.float32) + b3


if __name__ == "__main__":
    layers = [15, 10, 5]
    out_features = 3
    batch = 64          # small batch, multiple of 16 -> no hot-path batch padding

    root = jax.random.PRNGKey(0)
    kx, k1, k2, k3 = jax.random.split(root, 4)

    x = jax.random.normal(kx, (batch, layers[0]), jnp.float32)
    w1, b1 = init_linear(k1, layers[0], layers[1])
    w2, b2 = init_linear(k2, layers[1], layers[2])
    w3, b3 = init_linear(k3, layers[2], out_features)

    fwd = make_mlp3(w1, b1, w2, b2, w3, b3)   # one-time pad/cast of params
    out = fwd(x)
    jax.block_until_ready(out)
    assert out.shape == (batch, out_features)

    # Exact-path reference (same bf16 operand rounding, f32 accumulation).
    ref_q = ref_forward_bf16(x, w1, b1, w2, b2, w3, b3)
    assert jnp.allclose(out, ref_q, atol=2e-3, rtol=2e-3), "mismatch vs bf16 reference"

    # Loose check vs full-f32 PyTorch-equivalent math (bf16 operand rounding only).
    ref_f32 = jnp.maximum(x @ w1 + b1, 0.0)
    ref_f32 = jnp.maximum(ref_f32 @ w2 + b2, 0.0)
    ref_f32 = ref_f32 @ w3 + b3
    assert jnp.allclose(out, ref_f32, atol=5e-2), "mismatch vs f32 reference"

    print("KERNEL_OK")
</pallas_src>

<mosaic_0001>
module attributes {stable_mosaic.version = 11 : i64} {
  func.func @mlp3_kernel(%arg0: i32, %arg1: memref<32x128xbf16, #tpu.memory_space<vmem>>, %arg2: memref<128x128xbf16, #tpu.memory_space<vmem>>, %arg3: memref<1x128xf32, #tpu.memory_space<vmem>>, %arg4: memref<128x128xbf16, #tpu.memory_space<vmem>>, %arg5: memref<1x128xf32, #tpu.memory_space<vmem>>, %arg6: memref<128x128xbf16, #tpu.memory_space<vmem>>, %arg7: memref<1x128xf32, #tpu.memory_space<vmem>>, %arg8: memref<32x128xf32, #tpu.memory_space<vmem>>) attributes {dimension_semantics = [#tpu.dimension_semantics<parallel>], iteration_bounds = array<i64: 2>, scalar_prefetch = 0 : i64, scratch_operands = 0 : i64, tpu.core_type = #tpu.core_type<tc>, window_params = [{transform_indices = @transform_0, window_bounds = array<i64: 32, 128>}, {pipeline_mode = #tpu.pipeline_mode<synchronous>, transform_indices = @transform_1, window_bounds = array<i64: 128, 128>}, {pipeline_mode = #tpu.pipeline_mode<synchronous>, transform_indices = @transform_2, window_bounds = array<i64: 1, 128>}, {pipeline_mode = #tpu.pipeline_mode<synchronous>, transform_indices = @transform_3, window_bounds = array<i64: 128, 128>}, {pipeline_mode = #tpu.pipeline_mode<synchronous>, transform_indices = @transform_4, window_bounds = array<i64: 1, 128>}, {pipeline_mode = #tpu.pipeline_mode<synchronous>, transform_indices = @transform_5, window_bounds = array<i64: 128, 128>}, {pipeline_mode = #tpu.pipeline_mode<synchronous>, transform_indices = @transform_6, window_bounds = array<i64: 1, 128>}, {transform_indices = @transform_7, window_bounds = array<i64: 32, 128>}]} {
    %c0 = arith.constant 0 : index
    %c0_0 = arith.constant 0 : index
    %0 = vector.load %arg1[%c0, %c0_0] : memref<32x128xbf16, #tpu.memory_space<vmem>>, vector<32x128xbf16>
    %c0_1 = arith.constant 0 : index
    %c0_2 = arith.constant 0 : index
    %1 = vector.load %arg2[%c0_1, %c0_2] : memref<128x128xbf16, #tpu.memory_space<vmem>>, vector<128x128xbf16>
    %cst = arith.constant dense<0.000000e+00> : vector<32x128xf32>
    %2 = tpu.matmul %0, %1, %cst {dimension_numbers = #tpu.dot_dimension_numbers<[1], [0], [0], [1], [0, 0, 1, 1], [], []>} : vector<32x128xbf16>, vector<128x128xbf16>, vector<32x128xf32> -> vector<32x128xf32>
    %c0_3 = arith.constant 0 : index
    %c0_4 = arith.constant 0 : index
    %3 = vector.load %arg3[%c0_3, %c0_4] : memref<1x128xf32, #tpu.memory_space<vmem>>, vector<1x128xf32>
    %4 = vector.broadcast %3 : vector<1x128xf32> to vector<32x128xf32>
    %5 = arith.addf %2, %4 : vector<32x128xf32>
    %cst_5 = arith.constant 0.000000e+00 : f32
    %6 = vector.broadcast %cst_5 : f32 to vector<32x128xf32>
    %7 = arith.maximumf %5, %6 : vector<32x128xf32>
    %8 = arith.truncf %7 : vector<32x128xf32> to vector<32x128xbf16>
    %c0_6 = arith.constant 0 : index
    %c0_7 = arith.constant 0 : index
    %9 = vector.load %arg4[%c0_6, %c0_7] : memref<128x128xbf16, #tpu.memory_space<vmem>>, vector<128x128xbf16>
    %cst_8 = arith.constant dense<0.000000e+00> : vector<32x128xf32>
    %10 = tpu.matmul %8, %9, %cst_8 {dimension_numbers = #tpu.dot_dimension_numbers<[1], [0], [0], [1], [0, 0, 1, 1], [], []>} : vector<32x128xbf16>, vector<128x128xbf16>, vector<32x128xf32> -> vector<32x128xf32>
    %c0_9 = arith.constant 0 : index
    %c0_10 = arith.constant 0 : index
    %11 = vector.load %arg5[%c0_9, %c0_10] : memref<1x128xf32, #tpu.memory_space<vmem>>, vector<1x128xf32>
    %12 = vector.broadcast %11 : vector<1x128xf32> to vector<32x128xf32>
    %13 = arith.addf %10, %12 : vector<32x128xf32>
    %cst_11 = arith.constant 0.000000e+00 : f32
    %14 = vector.broadcast %cst_11 : f32 to vector<32x128xf32>
    %15 = arith.maximumf %13, %14 : vector<32x128xf32>
    %16 = arith.truncf %15 : vector<32x128xf32> to vector<32x128xbf16>
    %c0_12 = arith.constant 0 : index
    %c0_13 = arith.constant 0 : index
    %17 = vector.load %arg6[%c0_12, %c0_13] : memref<128x128xbf16, #tpu.memory_space<vmem>>, vector<128x128xbf16>
    %cst_14 = arith.constant dense<0.000000e+00> : vector<32x128xf32>
    %18 = tpu.matmul %16, %17, %cst_14 {dimension_numbers = #tpu.dot_dimension_numbers<[1], [0], [0], [1], [0, 0, 1, 1], [], []>} : vector<32x128xbf16>, vector<128x128xbf16>, vector<32x128xf32> -> vector<32x128xf32>
    %c0_15 = arith.constant 0 : index
    %c0_16 = arith.constant 0 : index
    %19 = vector.load %arg7[%c0_15, %c0_16] : memref<1x128xf32, #tpu.memory_space<vmem>>, vector<1x128xf32>
    %20 = vector.broadcast %19 : vector<1x128xf32> to vector<32x128xf32>
    %21 = arith.addf %18, %20 : vector<32x128xf32>
    %c0_17 = arith.constant 0 : index
    %c0_18 = arith.constant 0 : index
    %22 = vector.load %arg8[%c0_17, %c0_18] : memref<32x128xf32, #tpu.memory_space<vmem>>, vector<32x128xf32>
    tpu.vector_store %arg8[%c0_17, %c0_18], %21 {strides = array<i32>} : memref<32x128xf32, #tpu.memory_space<vmem>>, vector<32x128xf32>,
    return
  }
  func.func @transform_0(%arg0: i32) -> (i32, i32) {
    %c0_i32 = arith.constant 0 : i32
    %c0_i32_0 = arith.constant 0 : i32
    return %arg0, %c0_i32 : i32, i32
  }
  func.func @transform_1(%arg0: i32) -> (i32, i32) {
    %c0_i32 = arith.constant 0 : i32
    %c0_i32_0 = arith.constant 0 : i32
    %c0_i32_1 = arith.constant 0 : i32
    return %c0_i32, %c0_i32_0 : i32, i32
  }
  func.func @transform_2(%arg0: i32) -> (i32, i32) {
    %c0_i32 = arith.constant 0 : i32
    %c0_i32_0 = arith.constant 0 : i32
    %c0_i32_1 = arith.constant 0 : i32
    return %c0_i32, %c0_i32_0 : i32, i32
  }
  func.func @transform_3(%arg0: i32) -> (i32, i32) {
    %c0_i32 = arith.constant 0 : i32
    %c0_i32_0 = arith.constant 0 : i32
    %c0_i32_1 = arith.constant 0 : i32
    return %c0_i32, %c0_i32_0 : i32, i32
  }
  func.func @transform_4(%arg0: i32) -> (i32, i32) {
    %c0_i32 = arith.constant 0 : i32
    %c0_i32_0 = arith.constant 0 : i32
    %c0_i32_1 = arith.constant 0 : i32
    return %c0_i32, %c0_i32_0 : i32, i32
  }
  func.func @transform_5(%arg0: i32) -> (i32, i32) {
    %c0_i32 = arith.constant 0 : i32
    %c0_i32_0 = arith.constant 0 : i32
    %c0_i32_1 = arith.constant 0 : i32
    return %c0_i32, %c0_i32_0 : i32, i32
  }
  func.func @transform_6(%arg0: i32) -> (i32, i32) {
    %c0_i32 = arith.constant 0 : i32
    %c0_i32_0 = arith.constant 0 : i32
    %c0_i32_1 = arith.constant 0 : i32
    return %c0_i32, %c0_i32_0 : i32, i32
  }
  func.func @transform_7(%arg0: i32) -> (i32, i32) {
    %c0_i32 = arith.constant 0 : i32
    %c0_i32_0 = arith.constant 0 : i32
    return %arg0, %c0_i32 : i32, i32
  }
}

</mosaic_0001>

<llo_original>
// kernel: fwd.1
$region0: #{fwd.1}
  #allocation0 [shape = 'u32[]', space=smem, size = 0x4, offset = 0x4, fixed_abs, tag = 'smem constant byte address 0x4 - core index']
  #allocation1 [shape = 'u32[144,128]{1,0:T(1,128)}', space=vmem, size = 0x12000, scoped, tag = 'internal scratch']
  %s0 = inlined_call_operand.vmem [shape: bf16[64,128], index: 0, kind: input, shape index: {}]
  %s1 = inlined_call_operand.hbm [shape: bf16[128,128], index: 1, kind: input, shape index: {}]
  %s2 = inlined_call_operand.vmem [shape: f32[1,128], index: 2, kind: input, shape index: {}]
  %s3 = inlined_call_operand.vmem [shape: bf16[128,128], index: 3, kind: input, shape index: {}]
  %s4 = inlined_call_operand.vmem [shape: f32[1,128], index: 4, kind: input, shape index: {}]
  %s5 = inlined_call_operand.vmem [shape: bf16[128,128], index: 5, kind: input, shape index: {}]
  %s6 = inlined_call_operand.vmem [shape: f32[1,128], index: 6, kind: input, shape index: {}]
  %s7 = inlined_call_operand.vmem [shape: f32[64,128], index: 7, kind: output, shape index: {}]
  %s8 = sld [smem:[#allocation0]]
  $region65: #{fwd.1} parent=0
    _
  %s10 = ssub.s32 1, %s8
  %s11 = scalar_select 0, %s10, %s8
  $region1: #{fwd.1} parent=0
    #allocation2 [shape = 'u8[32768]{0}', space=vmem, size = 0x8000, scoped, tag = 'input window, operand 1, single buffered']
    #allocation3 [shape = 's32[2]{0}', space=sflag, size = 0x8, scoped, tag = 'scoped memory for fwd.1']
    %12 = vsyncpa [#allocation3], 0
    loop: start=0, step=1, limit=4
    $region2: #{fwd.1} parent=1 // loop_pre_header
      _
    $region3: #{fwd.1} parent=1 // loop_header
      %s14 = sphi 0, %s18
      %p15 = scmp.ge.s32.totalorder %s14, 4
      %s24 = sphi 0, %s26
      %s27 = sphi 0, %s24
      %s28 = sphi 0, %s27
      %s44 = sphi 0, %s28
      %s48 = sphi 0, %s48
      %s50 = sphi 0, %s48
      %s51 = sphi 0, %s50
      %s65 = sphi 0, %s51
      %s69 = sphi 0, %s69
      %s71 = sphi 0, %s69
      %s72 = sphi 0, %s71
      %s86 = sphi 0, %s72
      %s90 = sphi 0, %s90
      %s92 = sphi 0, %s90
      %s93 = sphi 0, %s92
      %s107 = sphi 0, %s93
      %s111 = sphi 0, %s111
      %s113 = sphi 0, %s111
      %s114 = sphi 0, %s113
      %s128 = sphi 0, %s114
      %s132 = sphi 0, %s132
      %s134 = sphi 0, %s132
      %s135 = sphi 0, %s134
      %s149 = sphi 0, %s135
      %s153 = sphi 0, %s153
      %s155 = sphi 0, %s153
      %s156 = sphi 0, %s155
      %s170 = sphi 0, %s156
      %s176 = sphi 0, %s178
      %s179 = sphi 0, %s176
      %s180 = sphi 0, %s179
      %s196 = sphi 0, %s180
    $region4: #{fwd.1} parent=1 // loop_header_branch
      %17 = sbr.rel (%p15) target = $region8
    $region5: #{fwd.1} parent=1 // loop_body
      %s19 = ssub.s32 %s14, 1
      %s20 = ssub.s32 %s14, 2
      %s21 = sadd.s32 %s14, 1
      %s22 = ssub.s32 %s14, %s21
      %p23 = scmp.eq.s32.totalorder %s22, 0
      %s25 = sadd.s32 %s24, 1
      %s26 = scalar_select %p23, %s24, %s25
      %p29 = pneg %p23
      %p30 = scmp.eq.s32.totalorder %s14, 1
      %p31 = por %p29, %p30
      %p32 = scmp.ne.s32.totalorder %s24, %s27
      %p33 = scmp.eq.s32.totalorder %s14, 0
      %p34 = por %p32, %p33
      %p35 = scmp.ne.s32.totalorder %s24, %s27
      %p36 = scmp.eq.s32.totalorder %s19, 1
      %p37 = por %p35, %p36
      %p38 = scmp.ne.s32.totalorder %s27, %s28
      %p39 = scmp.eq.s32.totalorder %s19, 0
      %p40 = por %p38, %p39
      %p41 = scmp.ne.s32.totalorder %s27, %s28
      %p42 = scmp.eq.s32.totalorder %s20, 1
      %p43 = por %p41, %p42
      %p45 = scmp.ne.s32.totalorder %s28, %s44
      %p46 = scmp.eq.s32.totalorder %s20, 0
      %p47 = por %p45, %p46
      %s49 = sadd.s32 %s48, 1
      %p52 = scmp.eq.s32.totalorder %s14, 1
      %p53 = scmp.ne.s32.totalorder %s48, %s50
      %p54 = scmp.eq.s32.totalorder %s14, 0
      %p55 = por %p53, %p54
      %p56 = scmp.ne.s32.totalorder %s48, %s50
      %p57 = scmp.eq.s32.totalorder %s19, 1
      %p58 = por %p56, %p57
      %p59 = scmp.ne.s32.totalorder %s50, %s51
      %p60 = scmp.eq.s32.totalorder %s19, 0
      %p61 = por %p59, %p60
      %p62 = scmp.ne.s32.totalorder %s50, %s51
      %p63 = scmp.eq.s32.totalorder %s20, 1
      %p64 = por %p62, %p63
      %p66 = scmp.ne.s32.totalorder %s51, %s65
      %p67 = scmp.eq.s32.totalorder %s20, 0
      %p68 = por %p66, %p67
      %s70 = sadd.s32 %s69, 1
      %p73 = scmp.eq.s32.totalorder %s14, 1
      %p74 = scmp.ne.s32.totalorder %s69, %s71
      %p75 = scmp.eq.s32.totalorder %s14, 0
      %p76 = por %p74, %p75
      %p77 = scmp.ne.s32.totalorder %s69, %s71
      %p78 = scmp.eq.s32.totalorder %s19, 1
      %p79 = por %p77, %p78
      %p80 = scmp.ne.s32.totalorder %s71, %s72
      %p81 = scmp.eq.s32.totalorder %s19, 0
      %p82 = por %p80, %p81
      %p83 = scmp.ne.s32.totalorder %s71, %s72
      %p84 = scmp.eq.s32.totalorder %s20, 1
      %p85 = por %p83, %p84
      %p87 = scmp.ne.s32.totalorder %s72, %s86
      %p88 = scmp.eq.s32.totalorder %s20, 0
      %p89 = por %p87, %p88
      %s91 = sadd.s32 %s90, 1
      %p94 = scmp.eq.s32.totalorder %s14, 1
      %p95 = scmp.ne.s32.totalorder %s90, %s92
      %p96 = scmp.eq.s32.totalorder %s14, 0
      %p97 = por %p95, %p96
      %p98 = scmp.ne.s32.totalorder %s90, %s92
      %p99 = scmp.eq.s32.totalorder %s19, 1
      %p100 = por %p98, %p99
      %p101 = scmp.ne.s32.totalorder %s92, %s93
      %p102 = scmp.eq.s32.totalorder %s19, 0
      %p103 = por %p101, %p102
      %p104 = scmp.ne.s32.totalorder %s92, %s93
      %p105 = scmp.eq.s32.totalorder %s20, 1
      %p106 = por %p104, %p105
      %p108 = scmp.ne.s32.totalorder %s93, %s107
      %p109 = scmp.eq.s32.totalorder %s20, 0
      %p110 = por %p108, %p109
      %s112 = sadd.s32 %s111, 1
      %p115 = scmp.eq.s32.totalorder %s14, 1
      %p116 = scmp.ne.s32.totalorder %s111, %s113
      %p117 = scmp.eq.s32.totalorder %s14, 0
      %p118 = por %p116, %p117
      %p119 = scmp.ne.s32.totalorder %s111, %s113
      %p120 = scmp.eq.s32.totalorder %s19, 1
      %p121 = por %p119, %p120
      %p122 = scmp.ne.s32.totalorder %s113, %s114
      %p123 = scmp.eq.s32.totalorder %s19, 0
      %p124 = por %p122, %p123
      %p125 = scmp.ne.s32.totalorder %s113, %s114
      %p126 = scmp.eq.s32.totalorder %s20, 1
      %p127 = por %p125, %p126
      %p129 = scmp.ne.s32.totalorder %s114, %s128
      %p130 = scmp.eq.s32.totalorder %s20, 0
      %p131 = por %p129, %p130
      %s133 = sadd.s32 %s132, 1
      %p136 = scmp.eq.s32.totalorder %s14, 1
      %p137 = scmp.ne.s32.totalorder %s132, %s134
      %p138 = scmp.eq.s32.totalorder %s14, 0
      %p139 = por %p137, %p138
      %p140 = scmp.ne.s32.totalorder %s132, %s134
      %p141 = scmp.eq.s32.totalorder %s19, 1
      %p142 = por %p140, %p141
      %p143 = scmp.ne.s32.totalorder %s134, %s135
      %p144 = scmp.eq.s32.totalorder %s19, 0
      %p145 = por %p143, %p144
      %p146 = scmp.ne.s32.totalorder %s134, %s135
      %p147 = scmp.eq.s32.totalorder %s20, 1
      %p148 = por %p146, %p147
      %p150 = scmp.ne.s32.totalorder %s135, %s149
      %p151 = scmp.eq.s32.totalorder %s20, 0
      %p152 = por %p150, %p151
      %s154 = sadd.s32 %s153, 1
      %p157 = scmp.eq.s32.totalorder %s14, 1
      %p158 = scmp.ne.s32.totalorder %s153, %s155
      %p159 = scmp.eq.s32.totalorder %s14, 0
      %p160 = por %p158, %p159
      %p161 = scmp.ne.s32.totalorder %s153, %s155
      %p162 = scmp.eq.s32.totalorder %s19, 1
      %p163 = por %p161, %p162
      %p164 = scmp.ne.s32.totalorder %s155, %s156
      %p165 = scmp.eq.s32.totalorder %s19, 0
      %p166 = por %p164, %p165
      %p167 = scmp.ne.s32.totalorder %s155, %s156
      %p168 = scmp.eq.s32.totalorder %s20, 1
      %p169 = por %p167, %p168
      %p171 = scmp.ne.s32.totalorder %s156, %s170
      %p172 = scmp.eq.s32.totalorder %s20, 0
      %p173 = por %p171, %p172
      %s174 = ssub.s32 %s14, %s21
      %p175 = scmp.eq.s32.totalorder %s174, 0
      %s177 = sadd.s32 %s176, 1
      %s178 = scalar_select %p175, %s176, %s177
      %p181 = pneg %p175
      %p182 = scmp.eq.s32.totalorder %s14, 1
      %p183 = por %p181, %p182
      %p184 = scmp.ne.s32.totalorder %s176, %s179
      %p185 = scmp.eq.s32.totalorder %s14, 0
      %p186 = por %p184, %p185
      %p187 = scmp.ne.s32.totalorder %s176, %s179
      %p188 = scmp.eq.s32.totalorder %s19, 1
      %p189 = por %p187, %p188
      %p190 = scmp.ne.s32.totalorder %s179, %s180
      %p191 = scmp.eq.s32.totalorder %s19, 0
      %p192 = por %p190, %p191
      %p193 = scmp.ne.s32.totalorder %s179, %s180
      %p194 = scmp.eq.s32.totalorder %s20, 1
      %p195 = por %p193, %p194
      %p197 = scmp.ne.s32.totalorder %s180, %s196
      %p198 = scmp.eq.s32.totalorder %s20, 0
      %p199 = por %p197, %p198
      %p200 = scmp.le.s32.totalorder 1, %s14
      %p201 = scmp.lt.s32.totalorder %s14, 3
      %p202 = pnand %p200, %p201
      %p203 = pneg %p202
      // Predicated region
      $region9: #{fwd.1} parent=5 // pred_check
        _
      $region10: #{fwd.1} parent=5 // pred_check_branch
        %205 = sbr.rel (%p202) target = $region12
      $region11: #{fwd.1} parent=5 // pred_region
        %s206 = ssub.s32 %s14, 1
        // Predicated region
        $region13: #{fwd.1} parent=11 // pred_check
          %p207 = pneg %p61
        $region14: #{fwd.1} parent=11 // pred_check_branch
          %209 = sbr.rel (%p207) target = $region16
        $region15: #{fwd.1} parent=11 // pred_region
          %s211 = ssub.s32 1024, 1024
          %212 = vsyncadd [#allocation3], %s211
          %s213 = sshll.u32 [#allocation2], 4
          %s214 = int_to_ptr.vmem [resolvable:$true] %s213
          %219 = dma.hbm_to_vmem [thread:$0]  %s1, 1024, %s214, [#allocation3], 64, 64, 4
        $region16: #{fwd.1} parent=11 // pred_fallthru
          _
        // Predicated region
        $region17: #{fwd.1} parent=11 // pred_check
          %p220 = pneg %p82
        $region18: #{fwd.1} parent=11 // pred_check_branch
          %222 = sbr.rel (%p220) target = $region20
        $region19: #{fwd.1} parent=11 // pred_region
          _
        $region20: #{fwd.1} parent=11 // pred_fallthru
          _
        // Predicated region
        $region21: #{fwd.1} parent=11 // pred_check
          %p223 = pneg %p103
        $region22: #{fwd.1} parent=11 // pred_check_branch
          %225 = sbr.rel (%p223) target = $region24
        $region23: #{fwd.1} parent=11 // pred_region
          _
        $region24: #{fwd.1} parent=11 // pred_fallthru
          _
        // Predicated region
        $region25: #{fwd.1} parent=11 // pred_check
          %p226 = pneg %p124
        $region26: #{fwd.1} parent=11 // pred_check_branch
          %228 = sbr.rel (%p226) target = $region28
        $region27: #{fwd.1} parent=11 // pred_region
          _
        $region28: #{fwd.1} parent=11 // pred_fallthru
          _
        // Predicated region
        $region29: #{fwd.1} parent=11 // pred_check
          %p229 = pneg %p145
        $region30: #{fwd.1} parent=11 // pred_check_branch
          %231 = sbr.rel (%p229) target = $region32
        $region31: #{fwd.1} parent=11 // pred_region
          _
        $region32: #{fwd.1} parent=11 // pred_fallthru
          _
        // Predicated region
        $region33: #{fwd.1} parent=11 // pred_check
          %p232 = pneg %p166
        $region34: #{fwd.1} parent=11 // pred_check_branch
          %234 = sbr.rel (%p232) target = $region36
        $region35: #{fwd.1} parent=11 // pred_region
          _
        $region36: #{fwd.1} parent=11 // pred_fallthru
          _
      $region12: #{fwd.1} parent=5 // pred_fallthru
        _
      %p235 = scmp.lt.s32.totalorder %s14, 2
      // Predicated region
      $region37: #{fwd.1} parent=5 // pred_check
        %p236 = pneg %p235
      $region38: #{fwd.1} parent=5 // pred_check_branch
        %238 = sbr.rel (%p236) target = $region40
      $region39: #{fwd.1} parent=5 // pred_region
        // Predicated region
        $region41: #{fwd.1} parent=39 // pred_check
          %p239 = pneg %p34
        $region42: #{fwd.1} parent=39 // pred_check_branch
          %241 = sbr.rel (%p239) target = $region44
        $region43: #{fwd.1} parent=39 // pred_region
          %s242 = smul.u32 4, %s14
          %p243 = scmp.lt.s32.totalorder %s242, 7
          %s244 = scalar_select %p243, %s242, 7
          %s245 = smul.addr %s244, 4
          %s246 = scalar_lea.vmem %s0, %s245
          %s247 = smul.u32 4, %s14
        $region44: #{fwd.1} parent=39 // pred_fallthru
          _
      $region40: #{fwd.1} parent=5 // pred_fallthru
        _
      %p248 = scmp.le.s32.totalorder 1, %s14
      %p249 = scmp.lt.s32.totalorder %s14, 3
      %p250 = pnand %p248, %p249
      %p251 = pneg %p250
      // Predicated region
      $region45: #{fwd.1} parent=5 // pred_check
        _
      $region46: #{fwd.1} parent=5 // pred_check_branch
        %253 = sbr.rel (%p250) target = $region48
      $region47: #{fwd.1} parent=5 // pred_region
        %s254 = ssub.s32 %s14, 1
        // Predicated region
        $region49: #{fwd.1} parent=47 // pred_check
          %p255 = pneg %p61
        $region50: #{fwd.1} parent=47 // pred_check_branch
          %257 = sbr.rel (%p255) target = $region52
        $region51: #{fwd.1} parent=47 // pred_region
          %258 = dma.done [#allocation3], 1024
        $region52: #{fwd.1} parent=47 // pred_fallthru
          _
        %s259 = smul.u32 4, %s19
        %p260 = scmp.lt.s32.totalorder %s259, 7
        %s261 = scalar_select %p260, %s259, 7
        %s262 = smul.addr %s261, 4
        %s263 = scalar_lea.vmem %s0, %s262
        %p264 = pneg %p40
        %p265 = pneg %p37
        %p266 = pneg %p61
        %p267 = pneg %p58
        %p268 = pneg %p82
        %p269 = pneg %p79
        %p270 = pneg %p103
        %p271 = pneg %p100
        %p272 = pneg %p124
        %p273 = pneg %p121
        %p274 = pneg %p145
        %p275 = pneg %p142
        %p276 = pneg %p166
        %p277 = pneg %p163
        %p278 = pneg %p192
        %p279 = pneg %p189
        %s280 = smul.u32 4, %s19
        %p281 = scmp.lt.s32.totalorder %s280, 7
        %s282 = scalar_select %p281, %s280, 7
        %s283 = smul.addr %s282, 8
        %s284 = scalar_lea.vmem %s7, %s283
        %s285 = smul.u32 4, %s19
        %p286 = scmp.lt.s32.totalorder %s285, 7
        %s287 = scalar_select %p286, %s285, 7
        %s288 = smul.addr %s287, 4
        %s289 = scalar_lea.vmem %s0, %s288
        %s290 = smul.u32 4, %s19
        %s291 = smul.u32 4, %s19
        %p292 = scmp.lt.s32.totalorder %s291, 7
        %s293 = scalar_select %p292, %s291, 7
        %s294 = smul.addr %s293, 8
        %s295 = scalar_lea.vmem %s7, %s294
        %s296 = smul.u32 4, %s19
        %v298 = vld [vmem:[%s289] sm:$0xf]
        %v299 = vld [vmem:[%s289 + $0x4] sm:$0xf]
        %v300 = vld [vmem:[%s289 + $0x8] sm:$0xf]
        %v301 = vld [vmem:[%s289 + $0xc] sm:$0xf]
        %v302 = vld [vmem:[#allocation2] sm:$0xf]
        %v303 = vld [vmem:[#allocation2 + $0x4] sm:$0xf]
        %v304 = vld [vmem:[#allocation2 + $0x8] sm:$0xf]
        %v305 = vld [vmem:[#allocation2 + $0xc] sm:$0xf]
        %v306 = vld [vmem:[#allocation2 + $0x10] sm:$0xf]
        %v307 = vld [vmem:[#allocation2 + $0x14] sm:$0xf]
        %v308 = vld [vmem:[#allocation2 + $0x18] sm:$0xf]
        %v309 = vld [vmem:[#allocation2 + $0x1c] sm:$0xf]
        %v310 = vld [vmem:[#allocation2 + $0x20] sm:$0xf]
        %v311 = vld [vmem:[#allocation2 + $0x24] sm:$0xf]
        %v312 = vld [vmem:[#allocation2 + $0x28] sm:$0xf]
        %v313 = vld [vmem:[#allocation2 + $0x2c] sm:$0xf]
        %v314 = vld [vmem:[#allocation2 + $0x30] sm:$0xf]
        %v315 = vld [vmem:[#allocation2 + $0x34] sm:$0xf]
        %v316 = vld [vmem:[#allocation2 + $0x38] sm:$0xf]
        %v317 = vld [vmem:[#allocation2 + $0x3c] sm:$0xf]
        %v318 = vld [vmem:[%s2] sm:$0x1]
        %v320 = vlaneseq
        %v321 = vshrl.u32 %v320, 7
        %v322 = vsub.s32 0, %v321
        %v323 = vrot.slane %v318, %v322
        %v329 = vunpack.c.l.b16 %v298
        %v330 = vunpack.c.l.b16 %v299
        %v331 = vunpack.c.l.b16 %v300
        %v332 = vunpack.c.l.b16 %v301
        %v333 = vpack.c.b16 %v330, %v329
        %v334 = vpack.c.b16 %v332, %v331
        %v353 = vunpack.c.l.b16 %v302
        %v354 = vunpack.c.l.b16 %v303
        %v355 = vunpack.c.l.b16 %v304
        %v356 = vunpack.c.l.b16 %v305
        %v357 = vunpack.c.l.b16 %v306
        %v358 = vunpack.c.l.b16 %v307
        %v359 = vunpack.c.l.b16 %v308
        %v360 = vunpack.c.l.b16 %v309
        %v361 = vunpack.c.l.b16 %v310
        %v362 = vunpack.c.l.b16 %v311
        %v363 = vunpack.c.l.b16 %v312
        %v364 = vunpack.c.l.b16 %v313
        %v365 = vunpack.c.l.b16 %v314
        %v366 = vunpack.c.l.b16 %v315
        %v367 = vunpack.c.l.b16 %v316
        %v368 = vunpack.c.l.b16 %v317
        %v369 = vpack.c.b16 %v354, %v353
        %v370 = vpack.c.b16 %v356, %v355
        %v371 = vpack.c.b16 %v358, %v357
        %v372 = vpack.c.b16 %v360, %v359
        %v373 = vpack.c.b16 %v362, %v361
        %v374 = vpack.c.b16 %v364, %v363
        %v375 = vpack.c.b16 %v366, %v365
        %v376 = vpack.c.b16 %v368, %v367
        %385 = vmatprep.subr.bf16.mxu0 0
        %386 = vmatpush1.bf16.msra.mxu0 %v369
        %387 = vmatprep.subr.bf16.mxu0 0
        %388 = vmatpush1.bf16.msra.mxu0 %v370
        %389 = vmatprep.subr.bf16.mxu0 0
        %390 = vmatpush1.bf16.msra.mxu0 %v371
        %391 = vmatprep.subr.bf16.mxu0 0
        %392 = vmatpush1.bf16.msra.mxu0 %v372
        %393 = vmatprep.subr.bf16.mxu0 0
        %394 = vmatpush1.bf16.msra.mxu0 %v373
        %395 = vmatprep.subr.bf16.mxu0 0
        %396 = vmatpush1.bf16.msra.mxu0 %v374
        %397 = vmatprep.subr.bf16.mxu0 0
        %398 = vmatpush1.bf16.msra.mxu0 %v375
        %399 = vmatprep.subr.bf16.mxu0 0
        %400 = vmatpush1.bf16.msra.mxu0 %v376
        %401 = vmatprep.subr.bf16.mxu0 0
        %402 = vmatpush1.bf16.msra.mxu0 0
        %403 = vmatprep.subr.bf16.mxu0 0
        %404 = vmatpush1.bf16.msra.mxu0 0
        %405 = vmatprep.subr.bf16.mxu0 0
        %406 = vmatpush1.bf16.msra.mxu0 0
        %407 = vmatprep.subr.bf16.mxu0 0
        %408 = vmatpush1.bf16.msra.mxu0 0
        %409 = vmatprep.subr.bf16.mxu0 0
        %410 = vmatpush1.bf16.msra.mxu0 0
        %411 = vmatprep.subr.bf16.mxu0 0
        %412 = vmatpush1.bf16.msra.mxu0 0
        %413 = vmatprep.subr.bf16.mxu0 0
        %414 = vmatpush1.bf16.msra.mxu0 0
        %415 = vmatprep.subr.bf16.mxu0 0
        %416 = vmatpush1.bf16.msra.mxu0 0
        %417 = vmatprep.mubr.bf16.mxu0 0
        %418 = vmatmul.mubr.bf16.gmra.mrb[0].mxu0 %v333
        %v419 = vpop.f32.mrb[0].mxu0
        %v420 = vadd.f32 %v323, %v419
        %v421 = vpop.f32.mrb[0].mxu0
        %v422 = vpop.f32.mrb[0].mxu0
        %v423 = vadd.f32 %v323, %v422
        %v424 = vpop.f32.mrb[0].mxu0
        %425 = vmatprep.mubr.bf16.mxu0 0
        %426 = vmatmul.mubr.bf16.gmra.mrb[0].mxu0 %v334
        %v427 = vpop.f32.mrb[0].mxu0
        %v428 = vadd.f32 %v323, %v427
        %v429 = vpop.f32.mrb[0].mxu0
        %v430 = vpop.f32.mrb[0].mxu0
        %v431 = vadd.f32 %v323, %v430
        %v432 = vpop.f32.mrb[0].mxu0
        %433 = vdwg.mxu0
        %v434 = vmax.f32 %v420, 0.0
        %v435 = vmax.f32 %v423, 0.0
        %v436 = vmax.f32 %v428, 0.0
        %v437 = vmax.f32 %v431, 0.0
        %v438 = vpack.c.bf16 %v435, %v434
        %v439 = vpack.c.bf16 %v437, %v436
        %v440 = vld [vmem:[%s3] sm:$0xf]
        %v441 = vld [vmem:[%s3 + $0x4] sm:$0xf]
        %v442 = vld [vmem:[%s3 + $0x8] sm:$0xf]
        %v443 = vld [vmem:[%s3 + $0xc] sm:$0xf]
        %v444 = vld [vmem:[%s3 + $0x10] sm:$0xf]
        %v445 = vld [vmem:[%s3 + $0x14] sm:$0xf]
        %v446 = vld [vmem:[%s3 + $0x18] sm:$0xf]
        %v447 = vld [vmem:[%s3 + $0x1c] sm:$0xf]
        %v448 = vld [vmem:[%s3 + $0x20] sm:$0xf]
        %v449 = vld [vmem:[%s3 + $0x24] sm:$0xf]
        %v450 = vld [vmem:[%s3 + $0x28] sm:$0xf]
        %v451 = vld [vmem:[%s3 + $0x2c] sm:$0xf]
        %v452 = vld [vmem:[%s3 + $0x30] sm:$0xf]
        %v453 = vld [vmem:[%s3 + $0x34] sm:$0xf]
        %v454 = vld [vmem:[%s3 + $0x38] sm:$0xf]
        %v455 = vld [vmem:[%s3 + $0x3c] sm:$0xf]
        %v456 = vld [vmem:[%s4] sm:$0x1]
        %v458 = vlaneseq
        %v459 = vshrl.u32 %v458, 7
        %v460 = vsub.s32 0, %v459
        %v461 = vrot.slane %v456, %v460
        %v479 = vunpack.c.l.b16 %v440
        %v480 = vunpack.c.l.b16 %v441
        %v481 = vunpack.c.l.b16 %v442
        %v482 = vunpack.c.l.b16 %v443
        %v483 = vunpack.c.l.b16 %v444
        %v484 = vunpack.c.l.b16 %v445
        %v485 = vunpack.c.l.b16 %v446
        %v486 = vunpack.c.l.b16 %v447
        %v487 = vunpack.c.l.b16 %v448
        %v488 = vunpack.c.l.b16 %v449
        %v489 = vunpack.c.l.b16 %v450
        %v490 = vunpack.c.l.b16 %v451
        %v491 = vunpack.c.l.b16 %v452
        %v492 = vunpack.c.l.b16 %v453
        %v493 = vunpack.c.l.b16 %v454
        %v494 = vunpack.c.l.b16 %v455
        %v495 = vpack.c.b16 %v480, %v479
        %v496 = vpack.c.b16 %v482, %v481
        %v497 = vpack.c.b16 %v484, %v483
        %v498 = vpack.c.b16 %v486, %v485
        %v499 = vpack.c.b16 %v488, %v487
        %v500 = vpack.c.b16 %v490, %v489
        %v501 = vpack.c.b16 %v492, %v491
        %v502 = vpack.c.b16 %v494, %v493
        %511 = vmatprep.subr.bf16.mxu0 0
        %512 = vmatpush1.bf16.msra.mxu0 %v495
        %513 = vmatprep.subr.bf16.mxu0 0
        %514 = vmatpush1.bf16.msra.mxu0 %v496
        %515 = vmatprep.subr.bf16.mxu0 0
        %516 = vmatpush1.bf16.msra.mxu0 %v497
        %517 = vmatprep.subr.bf16.mxu0 0
        %518 = vmatpush1.bf16.msra.mxu0 %v498
        %519 = vmatprep.subr.bf16.mxu0 0
        %520 = vmatpush1.bf16.msra.mxu0 %v499
        %521 = vmatprep.subr.bf16.mxu0 0
        %522 = vmatpush1.bf16.msra.mxu0 %v500
        %523 = vmatprep.subr.bf16.mxu0 0
        %524 = vmatpush1.bf16.msra.mxu0 %v501
        %525 = vmatprep.subr.bf16.mxu0 0
        %526 = vmatpush1.bf16.msra.mxu0 %v502
        %527 = vmatprep.subr.bf16.mxu0 0
        %528 = vmatpush1.bf16.msra.mxu0 0
        %529 = vmatprep.subr.bf16.mxu0 0
        %530 = vmatpush1.bf16.msra.mxu0 0
        %531 = vmatprep.subr.bf16.mxu0 0
        %532 = vmatpush1.bf16.msra.mxu0 0
        %533 = vmatprep.subr.bf16.mxu0 0
        %534 = vmatpush1.bf16.msra.mxu0 0
        %535 = vmatprep.subr.bf16.mxu0 0
        %536 = vmatpush1.bf16.msra.mxu0 0
        %537 = vmatprep.subr.bf16.mxu0 0
        %538 = vmatpush1.bf16.msra.mxu0 0
        %539 = vmatprep.subr.bf16.mxu0 0
        %540 = vmatpush1.bf16.msra.mxu0 0
        %541 = vmatprep.subr.bf16.mxu0 0
        %542 = vmatpush1.bf16.msra.mxu0 0
        %543 = vmatprep.mubr.bf16.mxu0 0
        %544 = vmatmul.mubr.bf16.gmra.mrb[0].mxu0 %v438
        %v545 = vpop.f32.mrb[0].mxu0
        %v546 = vadd.f32 %v461, %v545
        %v547 = vpop.f32.mrb[0].mxu0
        %v548 = vpop.f32.mrb[0].mxu0
        %v549 = vadd.f32 %v461, %v548
        %v550 = vpop.f32.mrb[0].mxu0
        %551 = vmatprep.mubr.bf16.mxu0 0
        %552 = vmatmul.mubr.bf16.gmra.mrb[0].mxu0 %v439
        %v553 = vpop.f32.mrb[0].mxu0
        %v554 = vadd.f32 %v461, %v553
        %v555 = vpop.f32.mrb[0].mxu0
        %v556 = vpop.f32.mrb[0].mxu0
        %v557 = vadd.f32 %v461, %v556
        %v558 = vpop.f32.mrb[0].mxu0
        %559 = vdwg.mxu0
        %v560 = vmax.f32 %v546, 0.0
        %v561 = vmax.f32 %v549, 0.0
        %v562 = vmax.f32 %v554, 0.0
        %v563 = vmax.f32 %v557, 0.0
        %v564 = vpack.c.bf16 %v561, %v560
        %v565 = vpack.c.bf16 %v563, %v562
        %v566 = vld [vmem:[%s5] sm:$0xf]
        %v567 = vld [vmem:[%s5 + $0x4] sm:$0xf]
        %v568 = vld [vmem:[%s5 + $0x8] sm:$0xf]
        %v569 = vld [vmem:[%s5 + $0xc] sm:$0xf]
        %v570 = vld [vmem:[%s5 + $0x10] sm:$0xf]
        %v571 = vld [vmem:[%s5 + $0x14] sm:$0xf]
        %v572 = vld [vmem:[%s5 + $0x18] sm:$0xf]
        %v573 = vld [vmem:[%s5 + $0x1c] sm:$0xf]
        %v574 = vld [vmem:[%s5 + $0x20] sm:$0xf]
        %v575 = vld [vmem:[%s5 + $0x24] sm:$0xf]
        %v576 = vld [vmem:[%s5 + $0x28] sm:$0xf]
        %v577 = vld [vmem:[%s5 + $0x2c] sm:$0xf]
        %v578 = vld [vmem:[%s5 + $0x30] sm:$0xf]
        %v579 = vld [vmem:[%s5 + $0x34] sm:$0xf]
        %v580 = vld [vmem:[%s5 + $0x38] sm:$0xf]
        %v581 = vld [vmem:[%s5 + $0x3c] sm:$0xf]
        %v582 = vld [vmem:[%s6] sm:$0x1]
        %v584 = vlaneseq
        %v585 = vshrl.u32 %v584, 7
        %v586 = vsub.s32 0, %v585
        %v587 = vrot.slane %v582, %v586
        %v605 = vunpack.c.l.b16 %v566
        %v606 = vunpack.c.l.b16 %v567
        %v607 = vunpack.c.l.b16 %v568
        %v608 = vunpack.c.l.b16 %v569
        %v609 = vunpack.c.l.b16 %v570
        %v610 = vunpack.c.l.b16 %v571
        %v611 = vunpack.c.l.b16 %v572
        %v612 = vunpack.c.l.b16 %v573
        %v613 = vunpack.c.l.b16 %v574
        %v614 = vunpack.c.l.b16 %v575
        %v615 = vunpack.c.l.b16 %v576
        %v616 = vunpack.c.l.b16 %v577
        %v617 = vunpack.c.l.b16 %v578
        %v618 = vunpack.c.l.b16 %v579
        %v619 = vunpack.c.l.b16 %v580
        %v620 = vunpack.c.l.b16 %v581
        %v621 = vpack.c.b16 %v606, %v605
        %v622 = vpack.c.b16 %v608, %v607
        %v623 = vpack.c.b16 %v610, %v609
        %v624 = vpack.c.b16 %v612, %v611
        %v625 = vpack.c.b16 %v614, %v613
        %v626 = vpack.c.b16 %v616, %v615
        %v627 = vpack.c.b16 %v618, %v617
        %v628 = vpack.c.b16 %v620, %v619
        %637 = vmatprep.subr.bf16.mxu0 0
        %638 = vmatpush1.bf16.msra.mxu0 %v621
        %639 = vmatprep.subr.bf16.mxu0 0
        %640 = vmatpush1.bf16.msra.mxu0 %v622
        %641 = vmatprep.subr.bf16.mxu0 0
        %642 = vmatpush1.bf16.msra.mxu0 %v623
        %643 = vmatprep.subr.bf16.mxu0 0
        %644 = vmatpush1.bf16.msra.mxu0 %v624
        %645 = vmatprep.subr.bf16.mxu0 0
        %646 = vmatpush1.bf16.msra.mxu0 %v625
        %647 = vmatprep.subr.bf16.mxu0 0
        %648 = vmatpush1.bf16.msra.mxu0 %v626
        %649 = vmatprep.subr.bf16.mxu0 0
        %650 = vmatpush1.bf16.msra.mxu0 %v627
        %651 = vmatprep.subr.bf16.mxu0 0
        %652 = vmatpush1.bf16.msra.mxu0 %v628
        %653 = vmatprep.subr.bf16.mxu0 0
        %654 = vmatpush1.bf16.msra.mxu0 0
        %655 = vmatprep.subr.bf16.mxu0 0
        %656 = vmatpush1.bf16.msra.mxu0 0
        %657 = vmatprep.subr.bf16.mxu0 0
        %658 = vmatpush1.bf16.msra.mxu0 0
        %659 = vmatprep.subr.bf16.mxu0 0
        %660 = vmatpush1.bf16.msra.mxu0 0
        %661 = vmatprep.subr.bf16.mxu0 0
        %662 = vmatpush1.bf16.msra.mxu0 0
        %663 = vmatprep.subr.bf16.mxu0 0
        %664 = vmatpush1.bf16.msra.mxu0 0
        %665 = vmatprep.subr.bf16.mxu0 0
        %666 = vmatpush1.bf16.msra.mxu0 0
        %667 = vmatprep.subr.bf16.mxu0 0
        %668 = vmatpush1.bf16.msra.mxu0 0
        %669 = vmatprep.mubr.bf16.mxu0 0
        %670 = vmatmul.mubr.bf16.gmra.mrb[0].mxu0 %v564
        %v671 = vpop.f32.mrb[0].mxu0
        %v672 = vadd.f32 %v587, %v671
        %v673 = vpop.f32.mrb[0].mxu0
        %v674 = vpop.f32.mrb[0].mxu0
        %v675 = vadd.f32 %v587, %v674
        %v676 = vpop.f32.mrb[0].mxu0
        %677 = vmatprep.mubr.bf16.mxu0 0
        %678 = vmatmul.mubr.bf16.gmra.mrb[0].mxu0 %v565
        %v679 = vpop.f32.mrb[0].mxu0
        %v680 = vadd.f32 %v587, %v679
        %v681 = vpop.f32.mrb[0].mxu0
        %v682 = vpop.f32.mrb[0].mxu0
        %v683 = vadd.f32 %v587, %v682
        %v684 = vpop.f32.mrb[0].mxu0
        %685 = vdwg.mxu0
        %686 = vst [vmem:[%s295] sm:$0xff] %v672
        %687 = vst [vmem:[%s295 + $0x8] sm:$0xff] %v675
        %688 = vst [vmem:[%s295 + $0x10] sm:$0xff] %v680
        %689 = vst [vmem:[%s295 + $0x18] sm:$0xff] %v683
        %s690 = smul.u32 4, %s19
        %p691 = scmp.lt.s32.totalorder %s690, 7
        %s692 = scalar_select %p691, %s690, 7
        %s693 = smul.addr %s692, 8
        %s694 = scalar_lea.vmem %s7, %s693
        // Predicated region
        $region53: #{fwd.1} parent=47 // pred_check
          %p695 = pneg %p189
        $region54: #{fwd.1} parent=47 // pred_check_branch
          %697 = sbr.rel (%p695) target = $region56
        $region55: #{fwd.1} parent=47 // pred_region
          %s698 = smul.u32 4, %s19
        $region56: #{fwd.1} parent=47 // pred_fallthru
          _
      $region48: #{fwd.1} parent=5 // pred_fallthru
        _
      %p699 = scmp.le.s32.totalorder 2, %s14
      // Predicated region
      $region57: #{fwd.1} parent=5 // pred_check
        %p700 = pneg %p699
      $region58: #{fwd.1} parent=5 // pred_check_branch
        %702 = sbr.rel (%p700) target = $region60
      $region59: #{fwd.1} parent=5 // pred_region
        %s703 = ssub.s32 %s14, 2
        // Predicated region
        $region61: #{fwd.1} parent=59 // pred_check
          %p704 = pneg %p195
        $region62: #{fwd.1} parent=59 // pred_check_branch
          %706 = sbr.rel (%p704) target = $region64
        $region63: #{fwd.1} parent=59 // pred_region
          %s707 = smul.u32 4, %s20
          %p708 = scmp.lt.s32.totalorder %s707, 7
          %s709 = scalar_select %p708, %s707, 7
          %s710 = smul.addr %s709, 8
          %s711 = scalar_lea.vmem %s7, %s710
        $region64: #{fwd.1} parent=59 // pred_fallthru
          _
      $region60: #{fwd.1} parent=5 // pred_fallthru
        _
    $region6: #{fwd.1} parent=1 // loop_footer
      %s18 = sadd.s32 1, %s14
    $region7: #{fwd.1} parent=1 // loop_footer_branch
      %13 = sbr.rel target = $region3
    $region8: #{fwd.1} parent=1 // loop_exit
      _
    %712 = vsyncpa [#allocation3], 1
    %s713 = scalar_lea.sflag [#allocation3], 1
    %714 = vsyncpa %s713, 1

</llo_original>
